<compile_context>
chip_gen: v5e
topology: v5e:2x2
jax: 0.10.0
libtpu: 0.0.40
codegen_flags: <defaults>
</compile_context>

<pallas_src>
import functools

import jax
import jax.numpy as jnp
from jax.experimental import pallas as pl
from jax.experimental.pallas import tpu as pltpu


# ----------------------------- tiling helpers ------------------------------ #

# Conservative per-kernel working-set budget: fits v5e's 16 MiB default scoped
# VMEM and v7x's 64 MiB physical VMEM with headroom.
_VMEM_BUDGET_BYTES = 8 * 1024 * 1024
_MAX_ROW_BLOCK = 1024


def _pick_row_block(n_rows, dim, arrays_per_step):
    """Largest row tile (multiple of 8) whose double-buffered blocks fit the budget."""
    if n_rows <= 8:
        return n_rows
    bytes_per_row = dim * 4 * arrays_per_step * 2          # f32, double-buffered
    tr = min(_MAX_ROW_BLOCK, max(8, _VMEM_BUDGET_BYTES // bytes_per_row))
    tr = max(8, (tr // 8) * 8)
    tr = min(tr, (n_rows // 8) * 8)
    return tr


# ----------------------------- Pallas kernels ------------------------------ #

def _make_normalize_sumsq_kernel(n_rows, row_block):
    """Row-wise L2-normalize two tables and accumulate sum of squares of the result."""

    def kernel(re_ref, im_ref, re_out, im_out, ss_out):
        i = pl.program_id(0)
        row0 = i * row_block
        rid = jax.lax.broadcasted_iota(jnp.int32, (row_block, 1), 0) + row0
        valid = rid < n_rows                                     # mask ragged last tile

        re = re_ref[...]
        im = im_ref[...]
        re_norm = jnp.maximum(jnp.sqrt(jnp.sum(re * re, axis=-1, keepdims=True)), 1e-12)
        im_norm = jnp.maximum(jnp.sqrt(jnp.sum(im * im, axis=-1, keepdims=True)), 1e-12)
        re_n = re / re_norm
        im_n = im / im_norm
        re_out[...] = re_n
        im_out[...] = im_n

        sq = jnp.where(valid, re_n * re_n + im_n * im_n, 0.0)    # (TR, D)
        part = jnp.sum(jnp.sum(sq, axis=-1, keepdims=True), axis=0, keepdims=True)

        @pl.when(i == 0)
        def _():
            ss_out[...] = jnp.zeros_like(ss_out)

        ss_out[...] += part

    return kernel


def _make_pair_sumsq_kernel(n_rows, row_block):
    """sum(a**2) + sum(b**2), tiled over rows with a resident (1,1) accumulator."""

    def kernel(a_ref, b_ref, ss_out):
        i = pl.program_id(0)
        rid = jax.lax.broadcasted_iota(jnp.int32, (row_block, 1), 0) + i * row_block
        valid = rid < n_rows

        a = a_ref[...]
        b = b_ref[...]
        sq = jnp.where(valid, a * a + b * b, 0.0)
        part = jnp.sum(jnp.sum(sq, axis=-1, keepdims=True), axis=0, keepdims=True)

        @pl.when(i == 0)
        def _():
            ss_out[...] = jnp.zeros_like(ss_out)

        ss_out[...] += part

    return kernel


def _make_score_loss_kernel(batch):
    """Fused gather(done by BlockSpec) + ComplEx score + clamp + softplus + mean."""
    inv_b = 1.0 / float(batch)

    def kernel(h_idx, t_idx, r_idx,                        # scalar-prefetch (SMEM)
               hr_ref, hi_ref, tr_ref, ti_ref, rr_ref, ri_ref,  # gathered (1, D) rows
               lab_ref,                                    # labels, (B,) in SMEM
               o_ref):                                     # (1, 1) running loss sum
        i = pl.program_id(0)
        hr = hr_ref[...]
        hi = hi_ref[...]
        tr = tr_ref[...]
        ti = ti_ref[...]
        rr = rr_ref[...]
        ri = ri_ref[...]
        # ComplEx trilinear score, refactored: 4 multiplies per lane instead of 8.
        prod = hr * (rr * tr + ri * ti) + hi * (rr * ti - ri * tr)
        score = jnp.sum(prod, axis=-1, keepdims=True)      # (1, 1)
        score = jnp.clip(score, -20.0, 20.0)
        z = -lab_ref[i] * score                            # (1, 1)
        # numerically-stable softplus: max(z, 0) + log1p(exp(-|z|))
        loss = jnp.maximum(z, 0.0) + jnp.log1p(jnp.exp(-jnp.abs(z)))

        @pl.when(i == 0)
        def _():
            o_ref[...] = jnp.zeros_like(o_ref)

        o_ref[...] += loss

        @pl.when(i == pl.num_programs(0) - 1)
        def _():
            o_ref[...] *= inv_b                            # mean over the true batch

    return kernel


# ------------------------------ Wrappers ----------------------------------- #

def normalize_rows_and_sumsq(w_re, w_im):
    """F.normalize(dim=1) of two same-shape tables + sum of squares of the result."""
    n, d = w_re.shape
    tr = _pick_row_block(n, d, arrays_per_step=4)          # 2 inputs + 2 outputs
    kernel = _make_normalize_sumsq_kernel(n, tr)
    row_spec = pl.BlockSpec((tr, d), lambda i: (i, 0))
    re_n, im_n, ss = pl.pallas_call(
        kernel,
        out_shape=(jax.ShapeDtypeStruct((n, d), w_re.dtype),
                   jax.ShapeDtypeStruct((n, d), w_im.dtype),
                   jax.ShapeDtypeStruct((1, 1), jnp.float32)),
        grid=(pl.cdiv(n, tr),),
        in_specs=[row_spec, row_spec],
        out_specs=(row_spec, row_spec, pl.BlockSpec((1, 1), lambda i: (0, 0))),
        compiler_params=pltpu.CompilerParams(
            dimension_semantics=("arbitrary",)),           # sumsq accumulates over rows
    )(w_re, w_im)
    return re_n, im_n, ss[0, 0]


def pair_sum_of_squares(a, b):
    n, d = a.shape
    tr = _pick_row_block(n, d, arrays_per_step=2)
    kernel = _make_pair_sumsq_kernel(n, tr)
    row_spec = pl.BlockSpec((tr, d), lambda i: (i, 0))
    out = pl.pallas_call(
        kernel,
        out_shape=jax.ShapeDtypeStruct((1, 1), jnp.float32),
        grid=(pl.cdiv(n, tr),),
        in_specs=[row_spec, row_spec],
        out_specs=pl.BlockSpec((1, 1), lambda i: (0, 0)),
        compiler_params=pltpu.CompilerParams(dimension_semantics=("arbitrary",)),
    )(a, b)
    return out[0, 0]


def gather_score_softplus_mean(ent_re_n, ent_im_n, rel_re, rel_im,
                               heads, tails, rels, labels):
    """Fused embedding gather + ComplEx score + clamp + softplus + mean."""
    b = heads.shape[0]
    _, d = ent_re_n.shape
    kernel = _make_score_loss_kernel(b)

    def head_row(i, h, t, r):
        return (h[i], 0)

    def tail_row(i, h, t, r):
        return (t[i], 0)

    def rel_row(i, h, t, r):
        return (r[i], 0)

    def gather_spec(index_map):
        # Row gather: element offset along the row axis, full (lane-dense) D.
        return pl.BlockSpec((pl.Element(1), d), index_map)

    grid_spec = pltpu.PrefetchScalarGridSpec(
        num_scalar_prefetch=3,                             # heads, tails, rels
        grid=(b,),
        in_specs=[gather_spec(head_row),                   # hr <- ent_re_n[heads[i]]
                  gather_spec(head_row),                   # hi <- ent_im_n[heads[i]]
                  gather_spec(tail_row),                   # tr <- ent_re_n[tails[i]]
                  gather_spec(tail_row),                   # ti <- ent_im_n[tails[i]]
                  gather_spec(rel_row),                    # rr <- rel_re[rels[i]]
                  gather_spec(rel_row),                    # ri <- rel_im[rels[i]]
                  pl.BlockSpec(memory_space=pltpu.MemorySpace.SMEM)],  # labels
        out_specs=pl.BlockSpec((1, 1), lambda i, h, t, r: (0, 0)),
    )
    out = pl.pallas_call(
        kernel,
        out_shape=jax.ShapeDtypeStruct((1, 1), jnp.float32),
        grid_spec=grid_spec,
        compiler_params=pltpu.CompilerParams(
            dimension_semantics=("arbitrary",)),           # loss accumulates over batch
    )(heads, tails, rels,
      ent_re_n, ent_im_n, ent_re_n, ent_im_n, rel_re, rel_im,
      labels.astype(jnp.float32))
    return out[0, 0]


# ------------------------- ComplEx forward (JAX) --------------------------- #

def init_complex_params(key, n_ent, n_rel, dim):
    """Deterministic xavier_normal init + row-normalized relation tables."""
    k1, k2, k3, k4 = jax.random.split(key, 4)
    std_ent = (2.0 / (n_ent + dim)) ** 0.5
    std_rel = (2.0 / (n_rel + dim)) ** 0.5
    ent_re = std_ent * jax.random.normal(k1, (n_ent, dim), jnp.float32)
    ent_im = std_ent * jax.random.normal(k2, (n_ent, dim), jnp.float32)
    rel_re = std_rel * jax.random.normal(k3, (n_rel, dim), jnp.float32)
    rel_im = std_rel * jax.random.normal(k4, (n_rel, dim), jnp.float32)
    # initialize(): normalize relation tables row-wise (sumsq output unused here).
    rel_re, rel_im, _ = normalize_rows_and_sumsq(rel_re, rel_im)
    return ent_re, ent_im, rel_re, rel_im


@functools.partial(jax.jit, static_argnames=("reg",))
def complex_forward(params, x, labels, reg=0.01):
    ent_re, ent_im, rel_re, rel_im = params

    # Single streaming pass over the entity tables: normalize + regularizer sumsq.
    ent_re_n, ent_im_n, ent_sumsq = normalize_rows_and_sumsq(ent_re, ent_im)

    heads, tails, rels = x[:, 0], x[:, 1], x[:, 2]
    loss = gather_score_softplus_mean(ent_re_n, ent_im_n, rel_re, rel_im,
                                      heads, tails, rels, labels)
    if reg == 0.0:
        return loss

    rel_sumsq = pair_sum_of_squares(rel_re, rel_im)
    # NOTE: sum of squares of the *normalized* entity tables (≈ n_ent), exactly
    # matching the PyTorch in-place-normalize + get_regularization semantics.
    return loss + reg * 0.5 * (ent_sumsq + rel_sumsq)


# --------------------------------- Main ------------------------------------ #

if __name__ == "__main__":
    n_ent, n_rel, dim, batch = 16, 8, 32, 8
    reg = 0.01

    key = jax.random.PRNGKey(0)
    k_param, k_triples, k_labels = jax.random.split(key, 3)

    params = init_complex_params(k_param, n_ent, n_rel, dim)

    kh, kt, kr = jax.random.split(k_triples, 3)
    heads = jax.random.randint(kh, (batch,), 0, n_ent, dtype=jnp.int32)
    tails = jax.random.randint(kt, (batch,), 0, n_ent, dtype=jnp.int32)
    rels = jax.random.randint(kr, (batch,), 0, n_rel, dtype=jnp.int32)
    x = jnp.stack([heads, tails, rels], axis=1)                     # [B, 3]
    labels = jnp.where(
        jax.random.bernoulli(k_labels, 0.5, (batch,)), 1.0, -1.0
    ).astype(jnp.float32)                                           # [B]

    loss = complex_forward(params, x, labels, reg=reg)
    jax.block_until_ready(loss)
    assert loss.shape == () and jnp.isfinite(loss)
    print("KERNEL_OK")
</pallas_src>

<mosaic_0001>
module attributes {stable_mosaic.version = 11 : i64} {
  func.func @kernel(%arg0: i32, %arg1: memref<8x32xf32, #tpu.memory_space<vmem>>, %arg2: memref<8x32xf32, #tpu.memory_space<vmem>>, %arg3: memref<8x32xf32, #tpu.memory_space<vmem>>, %arg4: memref<8x32xf32, #tpu.memory_space<vmem>>, %arg5: memref<1x1xf32, #tpu.memory_space<vmem>>) attributes {dimension_semantics = [#tpu.dimension_semantics<arbitrary>], iteration_bounds = array<i64: 1>, scalar_prefetch = 0 : i64, scratch_operands = 0 : i64, tpu.core_type = #tpu.core_type<tc>, window_params = [{transform_indices = @transform_0, window_bounds = array<i64: 8, 32>}, {transform_indices = @transform_1, window_bounds = array<i64: 8, 32>}, {transform_indices = @transform_2, window_bounds = array<i64: 8, 32>}, {transform_indices = @transform_3, window_bounds = array<i64: 8, 32>}, {pipeline_mode = #tpu.pipeline_mode<synchronous>, transform_indices = @transform_4, window_bounds = array<i64: 1, 1>}]} {
    %c8_i32 = arith.constant 8 : i32
    %0 = arith.muli %arg0, %c8_i32 : i32
    %1 = tpu.iota {dimensions = array<i32: 0>} : vector<8x1xi32>
    %2 = vector.broadcast %0 : i32 to vector<8x1xi32>
    %3 = arith.addi %1, %2 : vector<8x1xi32>
    %c8_i32_0 = arith.constant 8 : i32
    %4 = vector.broadcast %c8_i32_0 : i32 to vector<8x1xi32>
    %5 = arith.cmpi slt, %3, %4 : vector<8x1xi32>
    %c0 = arith.constant 0 : index
    %c0_1 = arith.constant 0 : index
    %6 = vector.load %arg1[%c0, %c0_1] : memref<8x32xf32, #tpu.memory_space<vmem>>, vector<8x32xf32>
    %c0_2 = arith.constant 0 : index
    %c0_3 = arith.constant 0 : index
    %7 = vector.load %arg2[%c0_2, %c0_3] : memref<8x32xf32, #tpu.memory_space<vmem>>, vector<8x32xf32>
    %8 = arith.mulf %6, %6 : vector<8x32xf32>
    %cst = arith.constant dense<0.000000e+00> : vector<8xf32>
    %9 = vector.multi_reduction <add>, %8, %cst [1] : vector<8x32xf32> to vector<8xf32>
    %10 = vector.shape_cast %9 : vector<8xf32> to vector<8x1xf32>
    %11 = math.sqrt %10 : vector<8x1xf32>
    %cst_4 = arith.constant 9.99999996E-13 : f32
    %12 = vector.broadcast %cst_4 : f32 to vector<8x1xf32>
    %13 = arith.maximumf %11, %12 : vector<8x1xf32>
    %14 = arith.mulf %7, %7 : vector<8x32xf32>
    %cst_5 = arith.constant dense<0.000000e+00> : vector<8xf32>
    %15 = vector.multi_reduction <add>, %14, %cst_5 [1] : vector<8x32xf32> to vector<8xf32>
    %16 = vector.shape_cast %15 : vector<8xf32> to vector<8x1xf32>
    %17 = math.sqrt %16 : vector<8x1xf32>
    %cst_6 = arith.constant 9.99999996E-13 : f32
    %18 = vector.broadcast %cst_6 : f32 to vector<8x1xf32>
    %19 = arith.maximumf %17, %18 : vector<8x1xf32>
    %20 = vector.broadcast %13 : vector<8x1xf32> to vector<8x32xf32>
    %21 = arith.divf %6, %20 : vector<8x32xf32>
    %22 = vector.broadcast %19 : vector<8x1xf32> to vector<8x32xf32>
    %23 = arith.divf %7, %22 : vector<8x32xf32>
    %c0_7 = arith.constant 0 : index
    %c0_8 = arith.constant 0 : index
    %24 = vector.load %arg3[%c0_7, %c0_8] : memref<8x32xf32, #tpu.memory_space<vmem>>, vector<8x32xf32>
    tpu.vector_store %arg3[%c0_7, %c0_8], %21 {strides = array<i32>} : memref<8x32xf32, #tpu.memory_space<vmem>>, vector<8x32xf32>,
    %c0_9 = arith.constant 0 : index
    %c0_10 = arith.constant 0 : index
    %25 = vector.load %arg4[%c0_9, %c0_10] : memref<8x32xf32, #tpu.memory_space<vmem>>, vector<8x32xf32>
    tpu.vector_store %arg4[%c0_9, %c0_10], %23 {strides = array<i32>} : memref<8x32xf32, #tpu.memory_space<vmem>>, vector<8x32xf32>,
    %26 = arith.mulf %21, %21 : vector<8x32xf32>
    %27 = arith.mulf %23, %23 : vector<8x32xf32>
    %28 = arith.addf %26, %27 : vector<8x32xf32>
    %cst_11 = arith.constant 0.000000e+00 : f32
    %29 = vector.shape_cast %5 : vector<8x1xi1> to vector<8x1xi1>
    %30 = vector.broadcast %29 : vector<8x1xi1> to vector<8x32xi1>
    %31 = vector.broadcast %cst_11 : f32 to vector<8x32xf32>
    %32 = arith.select %30, %28, %31 : vector<8x32xi1>, vector<8x32xf32>
    %cst_12 = arith.constant dense<0.000000e+00> : vector<8xf32>
    %33 = vector.multi_reduction <add>, %32, %cst_12 [1] : vector<8x32xf32> to vector<8xf32>
    %34 = vector.shape_cast %33 : vector<8xf32> to vector<8x1xf32>
    %cst_13 = arith.constant dense<0.000000e+00> : vector<1xf32>
    %35 = vector.multi_reduction <add>, %34, %cst_13 [0] : vector<8x1xf32> to vector<1xf32>
    %36 = vector.shape_cast %35 : vector<1xf32> to vector<1x1xf32>
    %c0_i32 = arith.constant 0 : i32
    %37 = arith.cmpi eq, %arg0, %c0_i32 : i32
    %38 = arith.extui %37 : i1 to i32
    %c0_i32_14 = arith.constant 0 : i32
    %39 = arith.cmpi ne, %38, %c0_i32_14 : i32
    scf.if %39 {
      %cst_19 = arith.constant 0.000000e+00 : f32
      %43 = vector.broadcast %cst_19 : f32 to vector<1x1xf32>
      %c0_20 = arith.constant 0 : index
      %c0_21 = arith.constant 0 : index
      %44 = vector.load %arg5[%c0_20, %c0_21] : memref<1x1xf32, #tpu.memory_space<vmem>>, vector<1x1xf32>
      tpu.vector_store %arg5[%c0_20, %c0_21], %43 {strides = array<i32>} : memref<1x1xf32, #tpu.memory_space<vmem>>, vector<1x1xf32>,
    } else {
    }
    %c0_15 = arith.constant 0 : index
    %c0_16 = arith.constant 0 : index
    %40 = vector.load %arg5[%c0_15, %c0_16] : memref<1x1xf32, #tpu.memory_space<vmem>>, vector<1x1xf32>
    %41 = arith.addf %40, %36 : vector<1x1xf32>
    %c0_17 = arith.constant 0 : index
    %c0_18 = arith.constant 0 : index
    %42 = vector.load %arg5[%c0_17, %c0_18] : memref<1x1xf32, #tpu.memory_space<vmem>>, vector<1x1xf32>
    tpu.vector_store %arg5[%c0_17, %c0_18], %41 {strides = array<i32>} : memref<1x1xf32, #tpu.memory_space<vmem>>, vector<1x1xf32>,
    return
  }
  func.func @transform_0(%arg0: i32) -> (i32, i32) {
    %c0_i32 = arith.constant 0 : i32
    %c0_i32_0 = arith.constant 0 : i32
    return %arg0, %c0_i32 : i32, i32
  }
  func.func @transform_1(%arg0: i32) -> (i32, i32) {
    %c0_i32 = arith.constant 0 : i32
    %c0_i32_0 = arith.constant 0 : i32
    return %arg0, %c0_i32 : i32, i32
  }
  func.func @transform_2(%arg0: i32) -> (i32, i32) {
    %c0_i32 = arith.constant 0 : i32
    %c0_i32_0 = arith.constant 0 : i32
    return %arg0, %c0_i32 : i32, i32
  }
  func.func @transform_3(%arg0: i32) -> (i32, i32) {
    %c0_i32 = arith.constant 0 : i32
    %c0_i32_0 = arith.constant 0 : i32
    return %arg0, %c0_i32 : i32, i32
  }
  func.func @transform_4(%arg0: i32) -> (i32, i32) {
    %c0_i32 = arith.constant 0 : i32
    %c0_i32_0 = arith.constant 0 : i32
    %c0_i32_1 = arith.constant 0 : i32
    return %c0_i32, %c0_i32_0 : i32, i32
  }
}

</mosaic_0001>

<llo_original>
// kernel: tpu_custom_call.1
$region0: #{tpu_custom_call.1}
  #allocation0 [shape = 'u32[]', space=smem, size = 0x4, offset = 0x4, fixed_abs, tag = 'smem constant byte address 0x4 - core index']
  #allocation1 [shape = 'u32[72,128]{1,0:T(1,128)}', space=vmem, size = 0x9000, scoped, tag = 'internal scratch']
  %s0 = inlined_call_operand.hbm [shape: f32[8,32], index: 0, kind: input, shape index: {}]
  %s1 = inlined_call_operand.hbm [shape: f32[8,32], index: 1, kind: input, shape index: {}]
  %s2 = inlined_call_operand.hbm [shape: f32[8,32], index: 2, kind: output, shape index: {0}]
  %s3 = inlined_call_operand.hbm [shape: f32[8,32], index: 3, kind: output, shape index: {1}]
  %s4 = inlined_call_operand.hbm [shape: f32[1,1], index: 4, kind: output, shape index: {2}]
  %5 = xla_tuple %s2, %s3, %s4
  %s6 = sld [smem:[#allocation0]]
  $region46: #{tpu_custom_call.1} parent=0
    _
  %s8 = ssub.s32 1, %s6
  %s9 = scalar_select 0, %s8, %s6
  $region1: #{tpu_custom_call.1} parent=0
    #allocation2 [shape = 'u8[4096]{0}', space=vmem, size = 0x1000, scoped, tag = 'input window, operand 0, single buffered']
    #allocation3 [shape = 's32[1]{0}', space=sflag, size = 0x4, scoped, tag = 'scoped memory for tpu_custom_call.1']
    #allocation4 [shape = 's32[1]{0}', space=sflag, size = 0x4, scoped, tag = 'scoped memory for tpu_custom_call.1']
    #allocation5 [shape = 'u8[4096]{0}', space=vmem, size = 0x1000, scoped, tag = 'input window, operand 1, single buffered']
    #allocation6 [shape = 's32[1]{0}', space=sflag, size = 0x4, scoped, tag = 'scoped memory for tpu_custom_call.1']
    #allocation7 [shape = 'u8[4096]{0}', space=vmem, size = 0x1000, scoped, tag = 'output window, operand 0, single buffered']
    #allocation8 [shape = 'u8[4096]{0}', space=vmem, size = 0x1000, scoped, tag = 'output window, operand 1, single buffered']
    #allocation9 [shape = 's32[1]{0}', space=sflag, size = 0x4, scoped, tag = 'scoped memory for tpu_custom_call.1']
    #allocation10 [shape = 'u8[512]{0}', space=vmem, size = 0x400, scoped, tag = 'output window, operand 2, single buffered']
    %10 = vsyncpa [#allocation3], 0
    %11 = vsyncpa [#allocation6], 0
    %12 = vsyncpa [#allocation4], 0
    %13 = vsyncpa [#allocation9], 0
    // Predicated region
    $region2: #{tpu_custom_call.1} parent=1 // pred_check
      _
    $region3: #{tpu_custom_call.1} parent=1 // pred_check_branch
      %15 = sbr.rel (0) target = $region5
    $region4: #{tpu_custom_call.1} parent=1 // pred_region
      %17 = vsyncadd [#allocation3], 0
      %s19 = sshll.u32 %s0, 4
      %s20 = int_to_ptr.hbm [resolvable:$true] %s19
      %s21 = sshll.u32 [#allocation2], 4
      %s22 = int_to_ptr.vmem [resolvable:$true] %s21
      %24 = dma.hbm_to_vmem [thread:$0]  %s20, 128, %s22, [#allocation3]
    $region5: #{tpu_custom_call.1} parent=1 // pred_fallthru
      _
    // Predicated region
    $region6: #{tpu_custom_call.1} parent=1 // pred_check
      _
    $region7: #{tpu_custom_call.1} parent=1 // pred_check_branch
      %26 = sbr.rel (0) target = $region9
    $region8: #{tpu_custom_call.1} parent=1 // pred_region
      %28 = vsyncadd [#allocation6], 0
      %s30 = sshll.u32 %s1, 4
      %s31 = int_to_ptr.hbm [resolvable:$true] %s30
      %s32 = sshll.u32 [#allocation5], 4
      %s33 = int_to_ptr.vmem [resolvable:$true] %s32
      %35 = dma.hbm_to_vmem [thread:$0]  %s31, 128, %s33, [#allocation6]
    $region9: #{tpu_custom_call.1} parent=1 // pred_fallthru
      _
    // Predicated region
    $region10: #{tpu_custom_call.1} parent=1 // pred_check
      _
    $region11: #{tpu_custom_call.1} parent=1 // pred_check_branch
      %37 = sbr.rel (0) target = $region13
    $region12: #{tpu_custom_call.1} parent=1 // pred_region
      %39 = dma.done [#allocation3], 128
    $region13: #{tpu_custom_call.1} parent=1 // pred_fallthru
      _
    // Predicated region
    $region14: #{tpu_custom_call.1} parent=1 // pred_check
      _
    $region15: #{tpu_custom_call.1} parent=1 // pred_check_branch
      %41 = sbr.rel (0) target = $region17
    $region16: #{tpu_custom_call.1} parent=1 // pred_region
      %43 = dma.done [#allocation6], 128
    $region17: #{tpu_custom_call.1} parent=1 // pred_fallthru
      _
    %s44 = smul.u32 0, 8
    %v45 = vlaneseq
    %v46 = vshrl.u32 %v45, 7
    %v47 = vstv %s44
    %v48 = vadd.s32 %v46, %v47
    %vm49 = vcmp.lt.s32.totalorder %v48, 8
    %v50 = vld [vmem:[#allocation2] sm:$0xff]
    %v51 = vld [vmem:[#allocation5] sm:$0xff]
    %v52 = vmul.f32 %v50, %v50
    %vm53 = vcmask 261120
    %v54 = vsel %vm53, %v52, 0.0
    %55 = vadd.xlane.f32.xlu0 %v54
    %v56 = vpop.xlane.xlu0 %55
    %v57 = vrsqrt.pop %v56
    %v58 = vmul.f32 %v57, %v56
    %v59 = vmul.f32 %v58, %v57
    %v60 = vmul.f32 0.5, %v59
    %v61 = vsub.f32 1.5, %v60
    %v62 = vmul.f32 %v57, %v61
    %v63 = vmul.f32 %v56, %v62
    %vm64 = vcmp.eq.f32.partialorder %v56, inf
    %v65 = vsel %vm64, %v56, %v63
    %vm66 = vcmp.eq.f32.partialorder %v56, 0.0
    %v67 = vand.u32 %v56, 2147483648
    %v68 = vsel %vm66, %v67, %v65
    %v69 = vmax.f32 %v68, 1e-12
    %v70 = vmul.f32 %v51, %v51
    %v71 = vsel %vm53, %v70, 0.0
    %72 = vadd.xlane.f32.xlu0 %v71
    %v73 = vpop.xlane.xlu0 %72
    %v74 = vrsqrt.pop %v73
    %v75 = vmul.f32 %v74, %v73
    %v76 = vmul.f32 %v75, %v74
    %v77 = vmul.f32 0.5, %v76
    %v78 = vsub.f32 1.5, %v77
    %v79 = vmul.f32 %v74, %v78
    %v80 = vmul.f32 %v73, %v79
    %vm81 = vcmp.eq.f32.partialorder %v73, inf
    %v82 = vsel %vm81, %v73, %v80
    %vm83 = vcmp.eq.f32.partialorder %v73, 0.0
    %v84 = vand.u32 %v73, 2147483648
    %v85 = vsel %vm83, %v84, %v82
    %v86 = vmax.f32 %v85, 1e-12
    %v87 = vrcp.pop %v69
    %v88 = vmul.f32 %v69, %v87
    %v89 = vsub.f32 1.0, %v88
    %v90 = vmul.f32 %v87, %v89
    %v91 = vadd.f32 %v87, %v90
    %vm92 = vweird.f32 %v69
    %vm93 = vweird.f32 %v87
    %vm94 = vmor %vm92, %vm93
    %v95 = vsel %vm94, %v87, %v91
    %v96 = vand.u32 2147483647, %v69
    %vm97 = vcmp.eq.f32.partialorder %v96, 8.507059e+37
    %v98 = vand.u32 %v69, 2147483648
    %v99 = vor.u32 1.1754944e-38, %v98
    %v100 = vsel %vm97, %v99, %v95
    %v101 = vmul.f32 %v50, %v100
    %v102 = vrcp.pop %v86
    %v103 = vmul.f32 %v86, %v102
    %v104 = vsub.f32 1.0, %v103
    %v105 = vmul.f32 %v102, %v104
    %v106 = vadd.f32 %v102, %v105
    %vm107 = vweird.f32 %v86
    %vm108 = vweird.f32 %v102
    %vm109 = vmor %vm107, %vm108
    %v110 = vsel %vm109, %v102, %v106
    %v111 = vand.u32 2147483647, %v86
    %vm112 = vcmp.eq.f32.partialorder %v111, 8.507059e+37
    %v113 = vand.u32 %v86, 2147483648
    %v114 = vor.u32 1.1754944e-38, %v113
    %v115 = vsel %vm112, %v114, %v110
    %v116 = vmul.f32 %v51, %v115
    %117 = vst.msk [vmem:[#allocation7] sm:$0xff] %vm53, %v101
    %118 = vst.msk [vmem:[#allocation8] sm:$0xff] %vm53, %v116
    %v119 = vmul.f32 %v101, %v101
    %v120 = vmul.f32 %v116, %v116
    %v121 = vadd.f32 %v119, %v120
    %v122 = vsel %vm49, 1, 0
    %vm123 = vcmp.eq.s32.totalorder %v122, 1
    %v124 = vsel %vm123, %v121, 0.0
    %v125 = vsel %vm53, %v124, 0.0
    %126 = vadd.xlane.f32.xlu0 %v125
    %v127 = vpop.xlane.xlu0 %126
    %v128 = vrot.slane %v127, 4
    %v129 = vadd.f32 %v127, %v128
    %v130 = vrot.slane %v129, 2
    %v131 = vadd.f32 %v129, %v130
    %v132 = vrot.slane %v131, 1
    %v133 = vadd.f32 %v131, %v132
    %p134 = scmp.eq.s32.totalorder 0, 0
    // Predicated region
    $region18: #{tpu_custom_call.1} parent=1 // pred_check
      %p135 = pneg %p134
    $region19: #{tpu_custom_call.1} parent=1 // pred_check_branch
      %137 = sbr.rel (%p135) target = $region21
    $region20: #{tpu_custom_call.1} parent=1 // pred_region
      %vm138 = vcmask 0
      %139 = vst.msk [vmem:[#allocation10] sm:$0x1] %vm138, 0.0
    $region21: #{tpu_custom_call.1} parent=1 // pred_fallthru
      _
    %v140 = vld [vmem:[#allocation10] sm:$0x1]
    %v141 = vadd.f32 %v140, %v133
    %vm142 = vcmask 0
    %143 = vst.msk [vmem:[#allocation10] sm:$0x1] %vm142, %v141
    // Predicated region
    $region22: #{tpu_custom_call.1} parent=1 // pred_check
      _
    $region23: #{tpu_custom_call.1} parent=1 // pred_check_branch
      %145 = sbr.rel (0) target = $region25
    $region24: #{tpu_custom_call.1} parent=1 // pred_region
      %147 = vsyncadd [#allocation4], 0
      %s149 = sshll.u32 [#allocation7], 4
      %s150 = int_to_ptr.vmem [resolvable:$true] %s149
      %s151 = sshll.u32 %s2, 4
      %s152 = int_to_ptr.hbm [resolvable:$true] %s151
      %154 = dma.vmem_to_hbm [thread:$0]  %s150, 128, %s152, [#allocation4]
    $region25: #{tpu_custom_call.1} parent=1 // pred_fallthru
      _
    // Predicated region
    $region26: #{tpu_custom_call.1} parent=1 // pred_check
      _
    $region27: #{tpu_custom_call.1} parent=1 // pred_check_branch
      %156 = sbr.rel (0) target = $region29
    $region28: #{tpu_custom_call.1} parent=1 // pred_region
      %158 = vsyncadd [#allocation9], 0
      %s160 = sshll.u32 [#allocation8], 4
      %s161 = int_to_ptr.vmem [resolvable:$true] %s160
      %s162 = sshll.u32 %s3, 4
      %s163 = int_to_ptr.hbm [resolvable:$true] %s162
      %165 = dma.vmem_to_hbm [thread:$0]  %s161, 128, %s163, [#allocation9]
    $region29: #{tpu_custom_call.1} parent=1 // pred_fallthru
      _
    // Predicated region
    $region30: #{tpu_custom_call.1} parent=1 // pred_check
      _
    $region31: #{tpu_custom_call.1} parent=1 // pred_check_branch
      %167 = sbr.rel (0) target = $region33
    $region32: #{tpu_custom_call.1} parent=1 // pred_region
      %169 = vsyncadd [#allocation9], 0
      %s171 = sshll.u32 [#allocation10], 4
      %s172 = int_to_ptr.vmem [resolvable:$true] %s171
      %s173 = sshll.u32 %s4, 4
      %s174 = int_to_ptr.hbm [resolvable:$true] %s173
      %176 = dma.vmem_to_hbm [thread:$0]  %s172, 16, %s174, [#allocation9]
    $region33: #{tpu_custom_call.1} parent=1 // pred_fallthru
      _
    // Predicated region
    $region34: #{tpu_custom_call.1} parent=1 // pred_check
      _
    $region35: #{tpu_custom_call.1} parent=1 // pred_check_branch
      %178 = sbr.rel (0) target = $region37
    $region36: #{tpu_custom_call.1} parent=1 // pred_region
      %180 = dma.done [#allocation4], 128
    $region37: #{tpu_custom_call.1} parent=1 // pred_fallthru
      _
    // Predicated region
    $region38: #{tpu_custom_call.1} parent=1 // pred_check
      _
    $region39: #{tpu_custom_call.1} parent=1 // pred_check_branch
      %182 = sbr.rel (0) target = $region41
    $region40: #{tpu_custom_call.1} parent=1 // pred_region
      %184 = dma.done [#allocation9], 128
    $region41: #{tpu_custom_call.1} parent=1 // pred_fallthru
      _
    // Predicated region
    $region42: #{tpu_custom_call.1} parent=1 // pred_check
      _
    $region43: #{tpu_custom_call.1} parent=1 // pred_check_branch
      %186 = sbr.rel (0) target = $region45
    $region44: #{tpu_custom_call.1} parent=1 // pred_region
      %188 = dma.done [#allocation9], 16
    $region45: #{tpu_custom_call.1} parent=1 // pred_fallthru
      _
    %189 = vsyncpa [#allocation3], 1
    %190 = vsyncpa [#allocation6], 1
    %191 = vsyncpa [#allocation4], 1
    %192 = vsyncpa [#allocation9], 1

</llo_original>
